<compile_context>
chip_gen: v6e
topology: v6e:2x2x1
jax: 0.10.0
libtpu: 0.0.40
codegen_flags: <defaults>
</compile_context>

<pallas_src>
import functools

import jax
import jax.numpy as jnp
from jax.experimental import pallas as pl
from jax.experimental.pallas import tpu as pltpu


def _round_up(a, b):
    return (a + b - 1) // b * b


def _round_down(a, b):
    return (a // b) * b


def pos_enc_kernel(x_ref, pe_ref, o_ref, *, batch, d_model):
    # x_ref / o_ref: (ts, B*D) activation tile;  pe_ref: (ts, D) table rows.
    pe = pe_ref[...].astype(x_ref.dtype)                      # (ts, D), loaded once
    for b in range(batch):                                    # static unroll
        sl = slice(b * d_model, (b + 1) * d_model)
        o_ref[:, sl] = x_ref[:, sl] + pe


def positional_encoding_forward(x, pos_table, *, seq_tile=None,
                                target_block_bytes=2 << 20,
                                vmem_working_set_bytes=12 << 20):
    """Pallas equivalent of PositionalEncoding.forward (eval mode).

    x:         (S, B, D)       -- seq-major layout, same as the PyTorch module
    pos_table: (max_len, D)    -- nn.Embedding weight (kaiming_normal init)
    returns:   (S, B, D), same dtype as x
    """
    S, B, D = x.shape
    max_len, d_tab = pos_table.shape
    assert d_tab == D, "table d_model mismatch"
    assert S <= max_len, "sequence longer than max_len"

    BD = B * D
    x_bytes = jnp.dtype(x.dtype).itemsize
    pe_bytes = jnp.dtype(pos_table.dtype).itemsize

    x2 = x.reshape(S, BD)  # free: collapses contiguous minor dims (no HBM pass)

    # ---- seq tile: ~target_block_bytes of x per block, capped by VMEM budget ----
    if seq_tile is None:
        row_x = BD * x_bytes
        # double-buffered x-in + out blocks + double-buffered pe block, per seq row
        row_all = 2 * (2 * row_x) + 2 * D * pe_bytes
        ts = min(target_block_bytes // max(row_x, 1),
                 vmem_working_set_bytes // max(row_all, 1))
    else:
        ts = seq_tile
    ts = max(int(ts), 8)

    if ts >= S:
        # Whole tensor fits in one target-sized block.  Prefer a 2-way seq split
        # so both v7x TensorCores stream; tiny sequences stay one full block.
        half = _round_up(pl.cdiv(S, 2), 8)
        ts = half if (S >= 16 and half < S) else S
    else:
        ts = max(8, _round_down(ts, 8))

    grid = pl.cdiv(S, ts)

    if grid == 1:
        # Single block covering everything: slice the (tiny) PE rows so both
        # blocks equal their full array dims -> no (8,128) divisibility needed.
        pe = pos_table if S == max_len else pos_table[:S]
    else:
        # ts is a multiple of 8; the ragged last seq block (for x/out and, near
        # S == max_len, for the table) is clipped/masked by Pallas.
        pe = pos_table

    # Memory-bound op: advertise ~zero flops and the real byte traffic.
    cost = pl.CostEstimate(
        flops=S * BD,
        transcendentals=0,
        bytes_accessed=2 * S * BD * x_bytes + S * D * pe_bytes,
    )

    kernel = functools.partial(pos_enc_kernel, batch=B, d_model=D)

    out2 = pl.pallas_call(
        kernel,
        out_shape=jax.ShapeDtypeStruct((S, BD), x.dtype),
        grid=(grid,),
        in_specs=[
            pl.BlockSpec((ts, BD), lambda i: (i, 0)),   # activation rows
            pl.BlockSpec((ts, D), lambda i: (i, 0)),    # PE rows (traffic S*D only)
        ],
        out_specs=pl.BlockSpec((ts, BD), lambda i: (i, 0)),
        compiler_params=pltpu.CompilerParams(
            dimension_semantics=("parallel",),          # v7x: split seq over 2 TCs
            vmem_limit_bytes=32 * 1024 * 1024,          # v5e scoped default is 16 MiB
        ),
        cost_estimate=cost,
    )(x2, pe)

    # TODO(synk): training-mode dropout (p=0.1) omitted; this matches eval().
    return out2.reshape(S, B, D)


if __name__ == "__main__":
    d_model = 32
    max_len = 250
    B = 2

    key = jax.random.PRNGKey(0)
    k_tab, k1, k2, k3, k4 = jax.random.split(key, 5)

    # nn.Embedding weight with kaiming_normal_(mode='fan_in'): std = sqrt(2/d_model).
    pos_table = jax.random.normal(k_tab, (max_len, d_model), jnp.float32) * jnp.sqrt(
        2.0 / d_model
    )

    def ref_fn(xx, table):
        return xx + table[: xx.shape[0]][:, None, :].astype(xx.dtype)

    # 1) Small case: single full-array block (grid == 1).
    S = 8
    x = jax.random.normal(k1, (S, B, d_model), jnp.float32)
    out = jax.block_until_ready(positional_encoding_forward(x, pos_table))
    assert out.shape == (S, B, d_model)
    assert jnp.allclose(out, ref_fn(x, pos_table), atol=1e-6), "mismatch (S=8)"

    # 2) Ragged short sequence (S not a multiple of 8).
    S2 = 5
    x2 = jax.random.normal(k2, (S2, B, d_model), jnp.float32)
    out2 = jax.block_until_ready(positional_encoding_forward(x2, pos_table))
    assert out2.shape == (S2, B, d_model)
    assert jnp.allclose(out2, ref_fn(x2, pos_table), atol=1e-6), "mismatch (S=5)"

    # 3) Multi-block: grid > 1, ragged last seq block, exercises the 2-TC split.
    S3 = 250
    x3 = jax.random.normal(k3, (S3, B, d_model), jnp.float32)
    out3 = jax.block_until_ready(positional_encoding_forward(x3, pos_table))
    assert out3.shape == (S3, B, d_model)
    assert jnp.allclose(out3, ref_fn(x3, pos_table), atol=1e-6), "mismatch (S=250)"

    # 4) bf16 activations stay bf16 end to end (halves HBM traffic).
    xb = jax.random.normal(k4, (S, B, d_model), jnp.float32).astype(jnp.bfloat16)
    outb = jax.block_until_ready(positional_encoding_forward(xb, pos_table))
    refb = xb + pos_table[:S][:, None, :].astype(jnp.bfloat16)
    assert outb.dtype == jnp.bfloat16
    assert jnp.allclose(outb.astype(jnp.float32), refb.astype(jnp.float32),
                        atol=1e-2, rtol=1e-2), "mismatch (bf16)"

    print("KERNEL_OK")
</pallas_src>

<mosaic_0001>
module attributes {stable_mosaic.version = 11 : i64} {
  func.func @pos_enc_kernel(%arg0: i32, %arg1: memref<8x64xf32, #tpu.memory_space<vmem>>, %arg2: memref<8x32xf32, #tpu.memory_space<vmem>>, %arg3: memref<8x64xf32, #tpu.memory_space<vmem>>) attributes {dimension_semantics = [#tpu.dimension_semantics<parallel>], iteration_bounds = array<i64: 1>, scalar_prefetch = 0 : i64, scratch_operands = 0 : i64, tpu.core_type = #tpu.core_type<tc>, window_params = [{transform_indices = @transform_0, window_bounds = array<i64: 8, 64>}, {transform_indices = @transform_1, window_bounds = array<i64: 8, 32>}, {transform_indices = @transform_2, window_bounds = array<i64: 8, 64>}]} {
    %c0 = arith.constant 0 : index
    %c0_0 = arith.constant 0 : index
    %0 = vector.load %arg2[%c0, %c0_0] : memref<8x32xf32, #tpu.memory_space<vmem>>, vector<8x32xf32>
    %c0_1 = arith.constant 0 : index
    %c0_2 = arith.constant 0 : index
    %1 = vector.load %arg1[%c0_1, %c0_2] : memref<8x64xf32, #tpu.memory_space<vmem>>, vector<8x32xf32>
    %2 = arith.addf %1, %0 : vector<8x32xf32>
    %c0_3 = arith.constant 0 : index
    %c0_4 = arith.constant 0 : index
    %3 = vector.load %arg3[%c0_3, %c0_4] : memref<8x64xf32, #tpu.memory_space<vmem>>, vector<8x32xf32>
    tpu.vector_store %arg3[%c0_3, %c0_4], %2 {strides = array<i32>} : memref<8x64xf32, #tpu.memory_space<vmem>>, vector<8x32xf32>,
    %c0_5 = arith.constant 0 : index
    %c32 = arith.constant 32 : index
    %4 = vector.load %arg1[%c0_5, %c32] : memref<8x64xf32, #tpu.memory_space<vmem>>, vector<8x32xf32>
    %5 = arith.addf %4, %0 : vector<8x32xf32>
    %c0_6 = arith.constant 0 : index
    %c32_7 = arith.constant 32 : index
    %6 = vector.load %arg3[%c0_6, %c32_7] : memref<8x64xf32, #tpu.memory_space<vmem>>, vector<8x32xf32>
    tpu.vector_store %arg3[%c0_6, %c32_7], %5 {strides = array<i32>} : memref<8x64xf32, #tpu.memory_space<vmem>>, vector<8x32xf32>,
    return
  }
  func.func @transform_0(%arg0: i32) -> (i32, i32) {
    %c0_i32 = arith.constant 0 : i32
    %c0_i32_0 = arith.constant 0 : i32
    return %arg0, %c0_i32 : i32, i32
  }
  func.func @transform_1(%arg0: i32) -> (i32, i32) {
    %c0_i32 = arith.constant 0 : i32
    %c0_i32_0 = arith.constant 0 : i32
    return %arg0, %c0_i32 : i32, i32
  }
  func.func @transform_2(%arg0: i32) -> (i32, i32) {
    %c0_i32 = arith.constant 0 : i32
    %c0_i32_0 = arith.constant 0 : i32
    return %arg0, %c0_i32 : i32, i32
  }
}

</mosaic_0001>

<llo_original>
// kernel: tpu_custom_call.1
$region0: #{tpu_custom_call.1}
  #allocation0 [shape = 'u32[]', space=smem, size = 0x4, offset = 0x4, fixed_abs, tag = 'smem constant byte address 0x4 - core index']
  #allocation1 [shape = 'u32[144,128]{1,0:T(1,128)}', space=vmem, size = 0x12000, scoped, tag = 'internal scratch']
  %s0 = inlined_call_operand.hbm [shape: f32[8,64], index: 0, kind: input, shape index: {}]
  %s1 = inlined_call_operand.hbm [shape: f32[8,32], index: 1, kind: input, shape index: {}]
  %s2 = inlined_call_operand.hbm [shape: f32[8,64], index: 2, kind: output, shape index: {}]
  %s3 = sld [smem:[#allocation0]]
  $region26: #{tpu_custom_call.1} parent=0
    _
  %s5 = ssub.s32 1, %s3
  %s6 = scalar_select 0, %s5, %s3
  $region1: #{tpu_custom_call.1} parent=0
    #allocation2 [shape = 'u8[4096]{0}', space=vmem, size = 0x1000, scoped, tag = 'input window, operand 0, single buffered']
    #allocation3 [shape = 's32[1]{0}', space=sflag, size = 0x4, scoped, tag = 'scoped memory for tpu_custom_call.1']
    #allocation4 [shape = 's32[1]{0}', space=sflag, size = 0x4, scoped, tag = 'scoped memory for tpu_custom_call.1']
    #allocation5 [shape = 'u8[4096]{0}', space=vmem, size = 0x1000, scoped, tag = 'input window, operand 1, single buffered']
    #allocation6 [shape = 's32[1]{0}', space=sflag, size = 0x4, scoped, tag = 'scoped memory for tpu_custom_call.1']
    #allocation7 [shape = 'u8[4096]{0}', space=vmem, size = 0x1000, scoped, tag = 'output window, operand 0, single buffered']
    %7 = vsyncpa [#allocation3], 0
    %8 = vsyncpa [#allocation6], 0
    %9 = vsyncpa [#allocation4], 0
    // Predicated region
    $region2: #{tpu_custom_call.1} parent=1 // pred_check
      _
    $region3: #{tpu_custom_call.1} parent=1 // pred_check_branch
      %11 = sbr.rel (0) target = $region5
    $region4: #{tpu_custom_call.1} parent=1 // pred_region
      %s13 = ssub.s32 128, 128
      %14 = vsyncadd [#allocation3], %s13
      %s16 = sshll.u32 [#allocation2], 4
      %s17 = int_to_ptr.vmem [resolvable:$true] %s16
      %19 = dma.hbm_to_vmem [thread:$0]  %s0, 128, %s17, [#allocation3]
    $region5: #{tpu_custom_call.1} parent=1 // pred_fallthru
      _
    // Predicated region
    $region6: #{tpu_custom_call.1} parent=1 // pred_check
      _
    $region7: #{tpu_custom_call.1} parent=1 // pred_check_branch
      %21 = sbr.rel (0) target = $region9
    $region8: #{tpu_custom_call.1} parent=1 // pred_region
      %s23 = ssub.s32 128, 128
      %24 = vsyncadd [#allocation6], %s23
      %s26 = sshll.u32 [#allocation5], 4
      %s27 = int_to_ptr.vmem [resolvable:$true] %s26
      %29 = dma.hbm_to_vmem [thread:$0]  %s1, 128, %s27, [#allocation6]
    $region9: #{tpu_custom_call.1} parent=1 // pred_fallthru
      _
    // Predicated region
    $region10: #{tpu_custom_call.1} parent=1 // pred_check
      _
    $region11: #{tpu_custom_call.1} parent=1 // pred_check_branch
      %31 = sbr.rel (0) target = $region13
    $region12: #{tpu_custom_call.1} parent=1 // pred_region
      %32 = dma.done [#allocation3], 128
    $region13: #{tpu_custom_call.1} parent=1 // pred_fallthru
      _
    // Predicated region
    $region14: #{tpu_custom_call.1} parent=1 // pred_check
      _
    $region15: #{tpu_custom_call.1} parent=1 // pred_check_branch
      %34 = sbr.rel (0) target = $region17
    $region16: #{tpu_custom_call.1} parent=1 // pred_region
      %35 = dma.done [#allocation6], 128
    $region17: #{tpu_custom_call.1} parent=1 // pred_fallthru
      _
    %v36 = vld [vmem:[#allocation5] sm:$0xff]
    %v37 = vld [vmem:[#allocation2] sm:$0xff]
    %v38 = vadd.f32 %v37, %v36
    %vm39 = vcmask 261120
    %40 = vst.msk [vmem:[#allocation7] sm:$0xff] %vm39, %v38
    %v41 = vld [vmem:[#allocation2] sm:$0xff]
    %43 = vrot.lane.b32.xlu0 %v36, 32
    %v44 = vpop.permute.xlu0 %43
    %v46 = vadd.f32 %v41, %v44
    %vm47 = vcmask 523520
    %48 = vst.msk [vmem:[#allocation7] sm:$0xff] %vm47, %v46
    // Predicated region
    $region18: #{tpu_custom_call.1} parent=1 // pred_check
      _
    $region19: #{tpu_custom_call.1} parent=1 // pred_check_branch
      %50 = sbr.rel (0) target = $region21
    $region20: #{tpu_custom_call.1} parent=1 // pred_region
      %s52 = ssub.s32 128, 128
      %53 = vsyncadd [#allocation4], %s52
      %s55 = sshll.u32 [#allocation7], 4
      %s56 = int_to_ptr.vmem [resolvable:$true] %s55
      %58 = dma.vmem_to_hbm [thread:$0]  %s56, 128, %s2, [#allocation4]
    $region21: #{tpu_custom_call.1} parent=1 // pred_fallthru
      _
    // Predicated region
    $region22: #{tpu_custom_call.1} parent=1 // pred_check
      _
    $region23: #{tpu_custom_call.1} parent=1 // pred_check_branch
      %60 = sbr.rel (0) target = $region25
    $region24: #{tpu_custom_call.1} parent=1 // pred_region
      %61 = dma.done [#allocation4], 128
    $region25: #{tpu_custom_call.1} parent=1 // pred_fallthru
      _
    %62 = vsyncpa [#allocation3], 1
    %63 = vsyncpa [#allocation6], 1
    %64 = vsyncpa [#allocation4], 1

</llo_original>
